<compile_context>
chip_gen: v6e
topology: v6e:2x2x1
jax: 0.10.0
libtpu: 0.0.40
codegen_flags: <defaults>
</compile_context>

<pallas_src>
import functools

import jax
import jax.numpy as jnp
from jax import lax
from jax.experimental import pallas as pl
from jax.experimental.pallas import tpu as pltpu


def _compiler_params(**kw):
    # Prefer the current name; fall back for older jax versions.
    cp = getattr(pltpu, "CompilerParams", None)
    if cp is None:
        cp = getattr(pltpu, "TPUCompilerParams")
    return cp(**kw)


def _block_spec(block_shape, index_map, buffers=None):
    """BlockSpec with optional deeper pipelining (pl.Buffered) when requested."""
    if buffers is not None and buffers != 2 and hasattr(pl, "Buffered"):
        try:
            return pl.BlockSpec(block_shape, index_map,
                                pipeline_mode=pl.Buffered(buffers))
        except TypeError:   # older jax without the pipeline_mode kwarg
            pass
    return pl.BlockSpec(block_shape, index_map)


# ----------------------------------------------------------------------------
# Fused kernel.  Grid = (2, tiles_per_half):
#   axis 0 ("parallel")  : megacore split of the N reduction (v7x: 2 TCs)
#   axis 1 ("arbitrary") : tiles of N within this half
# Each half accumulates per-class partials in (C, 1) VMEM scratch and, at its
# last step, writes [num, den, reg*scale (p==0 only)] into its own output
# block.  The wrapper sums the two partials and does num/den + reg.
# ----------------------------------------------------------------------------
def _fused_loss_kernel(pred_ref, target_ref, weight_ref, trans_ref, out_ref,
                       sp_acc, cnt_acc, *, n_total, tile_n, tiles_per_half,
                       scale):
    p = pl.program_id(0)          # megacore half
    i = pl.program_id(1)          # tile within this half

    @pl.when(i == 0)
    def _init():
        sp_acc[...] = jnp.zeros_like(sp_acc)
        cnt_acc[...] = jnp.zeros_like(cnt_acc)

    logp = pred_ref[...]          # (C, TILE_N) f32 log-probs, lane-dense
    t = target_ref[...]           # (1, TILE_N) i32 class ids

    # Ragged-tail / phantom-tile masking folded into the small (1, TILE_N)
    # target vector: invalid lanes get class -1, which never matches.
    base = (p * tiles_per_half + i) * tile_n
    lane = base + lax.broadcasted_iota(jnp.int32, t.shape, 1)
    t = jnp.where(lane < n_total, t, -1)

    # one-hot(target) via sublane-iota compare (no gather on TPU).
    row = lax.broadcasted_iota(jnp.int32, logp.shape, 0)          # (C, TILE_N)
    match = row == t                                              # (C, TILE_N)

    # Per-class partial sums (lane reduce -> XLU slot); select (not multiply)
    # so stale garbage in the padded tail can never propagate.
    sp_acc[...] += jnp.sum(jnp.where(match, logp, 0.0), axis=1, keepdims=True)
    cnt_acc[...] += jnp.sum(match.astype(jnp.float32), axis=1, keepdims=True)

    @pl.when(i == pl.num_programs(1) - 1)
    def _finalize():
        w = weight_ref[...]                                       # (C, 1)
        num = -jnp.sum(w * sp_acc[...])                           # scalar
        den = jnp.sum(w * cnt_acc[...])                           # scalar

        # Feature-transform regularizer: tiny (B,K,K); only the p == 0 half
        # contributes it so the wrapper-side sum counts it exactly once.
        tr = trans_ref[...]                                       # (B, K, K)
        b = tr.shape[0]
        mm = jnp.einsum('bij,bkj->bik', tr, tr,
                        preferred_element_type=jnp.float32)       # (B, K, K)
        r = lax.broadcasted_iota(jnp.int32, mm.shape, 1)
        c = lax.broadcasted_iota(jnp.int32, mm.shape, 2)
        diff = mm - (r == c).astype(mm.dtype)
        sq = jnp.sum(diff * diff, axis=2, keepdims=True)          # (B, K, 1)
        sq = jnp.sum(sq, axis=1, keepdims=True)                   # (B, 1, 1)
        reg = jnp.sum(jnp.sqrt(sq)) * (scale / b)
        reg = jnp.where(p == 0, reg, 0.0)

        lanes = lax.broadcasted_iota(jnp.int32, out_ref.shape, 2)  # (1, 8, 128)
        out_ref[...] = jnp.where(lanes == 0, num,
                       jnp.where(lanes == 1, den,
                       jnp.where(lanes == 2, reg, 0.0)))


def get_loss_forward(pred, target, trans_feat, weight,
                     mat_diff_loss_scale=0.001, tile_n=32768,
                     pred_layout="cn", input_buffers=None):
    """Fused PointNet++ sem-seg loss.

    pred: log-probs.  Preferred layout "cn" = (num_classes, num_points)
    (lane-dense, no transpose).  "nc" = (num_points, num_classes) is accepted
    for PyTorch compatibility but materializes a transpose in HBM.
    target: (N,) int class ids; trans_feat: (B, K, K); weight: (C,).
    input_buffers: optional pipeline depth for pred/target tiles (e.g. 3 on
    v5e if DMA gaps remain); default None keeps standard double buffering.
    """
    if pred_layout == "cn":
        C, N = pred.shape
        pred_cn = pred.astype(jnp.float32)
    elif pred_layout == "nc":
        N, C = pred.shape
        # TODO(synk): have the producer emit (C, N) directly (compute
        # log_softmax in the transposed layout); this fallback materializes a
        # full transpose in HBM (~2x extra traffic for a mem-bound reduction).
        pred_cn = pred.astype(jnp.float32).T
    else:
        raise ValueError(f"unknown pred_layout: {pred_layout!r}")

    B, K, K2 = trans_feat.shape
    assert K == K2
    assert target.shape == (N,)
    assert weight.shape == (C,)

    target2d = target.astype(jnp.int32).reshape(1, N)      # (1, N) lane-dense
    weight2d = weight.astype(jnp.float32).reshape(C, 1)    # (C, 1) per-sublane
    trans_f = trans_feat.astype(jnp.float32)

    # Tile over N: multiple of 128 (lane constraint), clamped to the padded N.
    tile_n = int(tile_n)
    tile_n = min(tile_n, max(128, pl.cdiv(N, 128) * 128))
    tile_n = max(128, (tile_n // 128) * 128)
    num_tiles = pl.cdiv(N, tile_n)

    # Leading parallel axis of size 2 splits the reduction across both
    # TensorCores on v7x; it is a harmless serial outer loop on v5e/v6e.
    tiles_per_half = pl.cdiv(num_tiles, 2)
    last_block = num_tiles - 1

    def data_map(p, i):
        # Clamp phantom tiles (grid padding of the second half) onto the last
        # real block; their contribution is masked to zero inside the kernel.
        return (0, jnp.minimum(p * tiles_per_half + i, last_block))

    kernel = functools.partial(
        _fused_loss_kernel, n_total=N, tile_n=tile_n,
        tiles_per_half=tiles_per_half, scale=float(mat_diff_loss_scale))

    call_kwargs = {}
    if hasattr(pl, "CostEstimate"):
        call_kwargs["cost_estimate"] = pl.CostEstimate(
            flops=int(3 * N * C + 2 * B * K * K * K + 4 * B * K * K),
            transcendentals=int(B),
            bytes_accessed=int(N * C * 4 + N * 4 + C * 4 + B * K * K * 4
                               + 2 * 8 * 128 * 4))

    partials = pl.pallas_call(
        kernel,
        out_shape=jax.ShapeDtypeStruct((2, 8, 128), jnp.float32),
        grid=(2, tiles_per_half),
        in_specs=[
            _block_spec((C, tile_n), data_map, input_buffers),    # pred tile
            _block_spec((1, tile_n), data_map, input_buffers),    # target tile
            pl.BlockSpec((C, 1), lambda p, i: (0, 0)),            # weights (resident)
            pl.BlockSpec((B, K, K), lambda p, i: (0, 0, 0)),      # trans_feat (resident)
        ],
        out_specs=pl.BlockSpec((1, 8, 128), lambda p, i: (p, 0, 0)),
        scratch_shapes=[
            pltpu.VMEM((C, 1), jnp.float32),   # per-class sum of picked log-probs
            pltpu.VMEM((C, 1), jnp.float32),   # per-class target counts
        ],
        compiler_params=_compiler_params(
            dimension_semantics=("parallel", "arbitrary"),
            vmem_limit_bytes=32 * 1024 * 1024),
        **call_kwargs,
    )(pred_cn, target2d, weight2d, trans_f)

    num = jnp.sum(partials[:, 0, 0])
    den = jnp.sum(partials[:, 0, 1])
    reg = jnp.sum(partials[:, 0, 2])   # only the p == 0 half is nonzero
    # Guard against den == 0 (all-invalid targets / zero weights) -> 0/0 NaN;
    # PyTorch would raise instead.  No effect for valid inputs.
    return num / jnp.maximum(den, jnp.float32(1e-30)) + reg


# ----------------------------------------------------------------------------
# Pure-JAX reference for correctness check (takes pred in PyTorch (N, C) layout)
# ----------------------------------------------------------------------------
def _reference(pred, target, trans_feat, weight, scale=0.001):
    picked_lp = jnp.take_along_axis(pred, target[:, None], axis=1)[:, 0]
    picked_w = weight[target]
    nll = -jnp.sum(picked_w * picked_lp) / jnp.sum(picked_w)
    K = trans_feat.shape[1]
    mm = jnp.einsum('bij,bkj->bik', trans_feat, trans_feat)
    diff = mm - jnp.eye(K, dtype=trans_feat.dtype)[None]
    reg = jnp.mean(jnp.sqrt(jnp.sum(diff * diff, axis=(1, 2))))
    return nll + reg * scale


if __name__ == "__main__":
    key = jax.random.PRNGKey(0)
    k1, k2, k3, k4 = jax.random.split(key, 4)

    N, C = 300, 13    # N points (batch*points flattened), C classes (sem-seg)
    B, K = 2, 16      # trans_feat: (B, K, K)

    # Producer emits pred directly in the lane-dense (C, N) layout (no transpose).
    logits_cn = jax.random.normal(k1, (C, N), dtype=jnp.float32)
    pred_cn = jax.nn.log_softmax(logits_cn, axis=0)                # (C, N) log-probs
    target = jax.random.randint(k2, (N,), 0, C, dtype=jnp.int32)
    weight = jax.random.uniform(k3, (C,), jnp.float32, 0.5, 1.5)   # per-class weights
    trans_feat = jax.random.normal(k4, (B, K, K), dtype=jnp.float32) * 0.1

    ref = _reference(pred_cn.T, target, trans_feat, weight)

    # Main path: lane-dense producer layout, default tile size.
    total = get_loss_forward(pred_cn, target, trans_feat, weight, pred_layout="cn")
    total = jax.block_until_ready(total)
    assert jnp.allclose(total, ref, rtol=1e-5, atol=1e-5), (total, ref)

    # Multi-tile + megacore-split path with ragged tail (3 tiles over 2 halves).
    total2 = get_loss_forward(pred_cn, target, trans_feat, weight,
                              pred_layout="cn", tile_n=128)
    total2 = jax.block_until_ready(total2)
    assert jnp.allclose(total2, ref, rtol=1e-5, atol=1e-5), (total2, ref)

    # PyTorch-layout compatibility path (incurs a transpose; correctness only).
    total3 = get_loss_forward(pred_cn.T, target, trans_feat, weight,
                              pred_layout="nc")
    total3 = jax.block_until_ready(total3)
    assert jnp.allclose(total3, ref, rtol=1e-5, atol=1e-5), (total3, ref)

    print("KERNEL_OK")
</pallas_src>

<mosaic_0001>
module attributes {stable_mosaic.version = 11 : i64} {
  func.func @_fused_loss_kernel(%arg0: i32, %arg1: i32, %arg2: memref<13x384xf32, #tpu.memory_space<vmem>>, %arg3: memref<1x384xi32, #tpu.memory_space<vmem>>, %arg4: memref<13x1xf32, #tpu.memory_space<vmem>>, %arg5: memref<2x16x16xf32, #tpu.memory_space<vmem>>, %arg6: memref<1x8x128xf32, #tpu.memory_space<vmem>>, %arg7: memref<13x1xf32, #tpu.memory_space<vmem>>, %arg8: memref<13x1xf32, #tpu.memory_space<vmem>>) attributes {dimension_semantics = [#tpu.dimension_semantics<parallel>, #tpu.dimension_semantics<arbitrary>], iteration_bounds = array<i64: 2, 1>, scalar_prefetch = 0 : i64, scratch_operands = 2 : i64, tpu.core_type = #tpu.core_type<tc>, window_params = [{transform_indices = @transform_0, window_bounds = array<i64: 13, 384>}, {transform_indices = @transform_1, window_bounds = array<i64: 1, 384>}, {pipeline_mode = #tpu.pipeline_mode<synchronous>, transform_indices = @transform_2, window_bounds = array<i64: 13, 1>}, {pipeline_mode = #tpu.pipeline_mode<synchronous>, transform_indices = @transform_3, window_bounds = array<i64: 2, 16, 16>}, {transform_indices = @transform_4, window_bounds = array<i64: 1, 8, 128>}]} {
    %c0_i32 = arith.constant 0 : i32
    %0 = arith.cmpi eq, %arg1, %c0_i32 : i32
    %1 = arith.extui %0 : i1 to i32
    %c0_i32_0 = arith.constant 0 : i32
    %2 = arith.cmpi ne, %1, %c0_i32_0 : i32
    scf.if %2 {
      %cst_16 = arith.constant 0.000000e+00 : f32
      %35 = vector.broadcast %cst_16 : f32 to vector<13x1xf32>
      %c0_17 = arith.constant 0 : index
      %c0_18 = arith.constant 0 : index
      %36 = vector.load %arg7[%c0_17, %c0_18] : memref<13x1xf32, #tpu.memory_space<vmem>>, vector<13x1xf32>
      tpu.vector_store %arg7[%c0_17, %c0_18], %35 {strides = array<i32>} : memref<13x1xf32, #tpu.memory_space<vmem>>, vector<13x1xf32>,
      %cst_19 = arith.constant 0.000000e+00 : f32
      %37 = vector.broadcast %cst_19 : f32 to vector<13x1xf32>
      %c0_20 = arith.constant 0 : index
      %c0_21 = arith.constant 0 : index
      %38 = vector.load %arg8[%c0_20, %c0_21] : memref<13x1xf32, #tpu.memory_space<vmem>>, vector<13x1xf32>
      tpu.vector_store %arg8[%c0_20, %c0_21], %37 {strides = array<i32>} : memref<13x1xf32, #tpu.memory_space<vmem>>, vector<13x1xf32>,
    } else {
    }
    %c0 = arith.constant 0 : index
    %c0_1 = arith.constant 0 : index
    %3 = vector.load %arg2[%c0, %c0_1] : memref<13x384xf32, #tpu.memory_space<vmem>>, vector<13x384xf32>
    %c0_2 = arith.constant 0 : index
    %c0_3 = arith.constant 0 : index
    %4 = vector.load %arg3[%c0_2, %c0_3] : memref<1x384xi32, #tpu.memory_space<vmem>>, vector<1x384xi32>
    %c1_i32 = arith.constant 1 : i32
    %5 = arith.muli %arg0, %c1_i32 : i32
    %6 = arith.addi %5, %arg1 : i32
    %c384_i32 = arith.constant 384 : i32
    %7 = arith.muli %6, %c384_i32 : i32
    %8 = tpu.iota {dimensions = array<i32: 1>} : vector<1x384xi32>
    %9 = vector.broadcast %7 : i32 to vector<1x384xi32>
    %10 = arith.addi %9, %8 : vector<1x384xi32>
    %c300_i32 = arith.constant 300 : i32
    %11 = vector.broadcast %c300_i32 : i32 to vector<1x384xi32>
    %12 = arith.cmpi slt, %10, %11 : vector<1x384xi32>
    %c-1_i32 = arith.constant -1 : i32
    %13 = vector.broadcast %c-1_i32 : i32 to vector<1x384xi32>
    %14 = arith.select %12, %4, %13 : vector<1x384xi1>, vector<1x384xi32>
    %15 = tpu.iota {dimensions = array<i32: 0>} : vector<13x384xi32>
    %16 = vector.broadcast %14 : vector<1x384xi32> to vector<13x384xi32>
    %17 = arith.cmpi eq, %15, %16 : vector<13x384xi32>
    %c0_4 = arith.constant 0 : index
    %c0_5 = arith.constant 0 : index
    %18 = vector.load %arg7[%c0_4, %c0_5] : memref<13x1xf32, #tpu.memory_space<vmem>>, vector<13x1xf32>
    %cst = arith.constant 0.000000e+00 : f32
    %19 = vector.broadcast %cst : f32 to vector<13x384xf32>
    %20 = arith.select %17, %3, %19 : vector<13x384xi1>, vector<13x384xf32>
    %cst_6 = arith.constant dense<0.000000e+00> : vector<13xf32>
    %21 = vector.multi_reduction <add>, %20, %cst_6 [1] : vector<13x384xf32> to vector<13xf32>
    %22 = vector.shape_cast %21 : vector<13xf32> to vector<13x1xf32>
    %23 = arith.addf %18, %22 : vector<13x1xf32>
    %c0_7 = arith.constant 0 : index
    %c0_8 = arith.constant 0 : index
    %24 = vector.load %arg7[%c0_7, %c0_8] : memref<13x1xf32, #tpu.memory_space<vmem>>, vector<13x1xf32>
    tpu.vector_store %arg7[%c0_7, %c0_8], %23 {strides = array<i32>} : memref<13x1xf32, #tpu.memory_space<vmem>>, vector<13x1xf32>,
    %c0_9 = arith.constant 0 : index
    %c0_10 = arith.constant 0 : index
    %25 = vector.load %arg8[%c0_9, %c0_10] : memref<13x1xf32, #tpu.memory_space<vmem>>, vector<13x1xf32>
    %26 = arith.extui %17 : vector<13x384xi1> to vector<13x384xi32>
    %27 = arith.sitofp %26 : vector<13x384xi32> to vector<13x384xf32>
    %cst_11 = arith.constant dense<0.000000e+00> : vector<13xf32>
    %28 = vector.multi_reduction <add>, %27, %cst_11 [1] : vector<13x384xf32> to vector<13xf32>
    %29 = vector.shape_cast %28 : vector<13xf32> to vector<13x1xf32>
    %30 = arith.addf %25, %29 : vector<13x1xf32>
    %c0_12 = arith.constant 0 : index
    %c0_13 = arith.constant 0 : index
    %31 = vector.load %arg8[%c0_12, %c0_13] : memref<13x1xf32, #tpu.memory_space<vmem>>, vector<13x1xf32>
    tpu.vector_store %arg8[%c0_12, %c0_13], %30 {strides = array<i32>} : memref<13x1xf32, #tpu.memory_space<vmem>>, vector<13x1xf32>,
    %c0_i32_14 = arith.constant 0 : i32
    %32 = arith.cmpi eq, %arg1, %c0_i32_14 : i32
    %33 = arith.extui %32 : i1 to i32
    %c0_i32_15 = arith.constant 0 : i32
    %34 = arith.cmpi ne, %33, %c0_i32_15 : i32
    scf.if %34 {
      %c0_16 = arith.constant 0 : index
      %c0_17 = arith.constant 0 : index
      %35 = vector.load %arg4[%c0_16, %c0_17] : memref<13x1xf32, #tpu.memory_space<vmem>>, vector<13x1xf32>
      %c0_18 = arith.constant 0 : index
      %c0_19 = arith.constant 0 : index
      %36 = vector.load %arg7[%c0_18, %c0_19] : memref<13x1xf32, #tpu.memory_space<vmem>>, vector<13x1xf32>
      %37 = arith.mulf %35, %36 : vector<13x1xf32>
      %38 = vector.shape_cast %37 : vector<13x1xf32> to vector<1x13x1xf32>
      %cst_20 = arith.constant dense<0.000000e+00> : vector<1xf32>
      %39 = vector.multi_reduction <add>, %38, %cst_20 [1, 2] : vector<1x13x1xf32> to vector<1xf32>
      %40 = vector.shape_cast %39 : vector<1xf32> to vector<1x1x1xf32>
      %41 = vector.extract %40[0, 0, 0] : f32 from vector<1x1x1xf32>
      %cst_21 = arith.constant 0.000000e+00 : f32
      %42 = arith.subf %cst_21, %41 : f32
      %c0_22 = arith.constant 0 : index
      %c0_23 = arith.constant 0 : index
      %43 = vector.load %arg8[%c0_22, %c0_23] : memref<13x1xf32, #tpu.memory_space<vmem>>, vector<13x1xf32>
      %44 = arith.mulf %35, %43 : vector<13x1xf32>
      %45 = vector.shape_cast %44 : vector<13x1xf32> to vector<1x13x1xf32>
      %cst_24 = arith.constant dense<0.000000e+00> : vector<1xf32>
      %46 = vector.multi_reduction <add>, %45, %cst_24 [1, 2] : vector<1x13x1xf32> to vector<1xf32>
      %47 = vector.shape_cast %46 : vector<1xf32> to vector<1x1x1xf32>
      %48 = vector.extract %47[0, 0, 0] : f32 from vector<1x1x1xf32>
      %c0_25 = arith.constant 0 : index
      %c0_26 = arith.constant 0 : index
      %c0_27 = arith.constant 0 : index
      %49 = vector.load %arg5[%c0_25, %c0_26, %c0_27] : memref<2x16x16xf32, #tpu.memory_space<vmem>>, vector<2x16x16xf32>
      "tpu.trace_start"() <{level = 10 : i32, message = "bij,bkj->bik"}> : () -> ()
      %cst_28 = arith.constant dense<0.000000e+00> : vector<2x16x16xf32>
      %50 = tpu.matmul %49, %49, %cst_28 {dimension_numbers = #tpu.dot_dimension_numbers<[2], [2], [1], [1], [0, 0, 0, 1, 1, 1], [0], [0]>} : vector<2x16x16xf32>, vector<2x16x16xf32>, vector<2x16x16xf32> -> vector<2x16x16xf32>
      "tpu.trace_stop"() : () -> ()
      %51 = tpu.iota {dimensions = array<i32: 1>} : vector<2x16x16xi32>
      %52 = tpu.iota {dimensions = array<i32: 2>} : vector<2x16x16xi32>
      %53 = arith.cmpi eq, %51, %52 : vector<2x16x16xi32>
      %54 = arith.extui %53 : vector<2x16x16xi1> to vector<2x16x16xi32>
      %55 = arith.sitofp %54 : vector<2x16x16xi32> to vector<2x16x16xf32>
      %56 = arith.subf %50, %55 : vector<2x16x16xf32>
      %57 = arith.mulf %56, %56 : vector<2x16x16xf32>
      %cst_29 = arith.constant dense<0.000000e+00> : vector<2x16xf32>
      %58 = vector.multi_reduction <add>, %57, %cst_29 [2] : vector<2x16x16xf32> to vector<2x16xf32>
      %59 = vector.shape_cast %58 : vector<2x16xf32> to vector<2x16x1xf32>
      %cst_30 = arith.constant dense<0.000000e+00> : vector<2x1xf32>
      %60 = vector.multi_reduction <add>, %59, %cst_30 [1] : vector<2x16x1xf32> to vector<2x1xf32>
      %61 = vector.shape_cast %60 : vector<2x1xf32> to vector<2x1x1xf32>
      %62 = math.sqrt %61 : vector<2x1x1xf32>
      %63 = vector.shape_cast %62 : vector<2x1x1xf32> to vector<1x2x1x1xf32>
      %cst_31 = arith.constant dense<0.000000e+00> : vector<1xf32>
      %64 = vector.multi_reduction <add>, %63, %cst_31 [1, 2, 3] : vector<1x2x1x1xf32> to vector<1xf32>
      %65 = vector.shape_cast %64 : vector<1xf32> to vector<1x1x1x1xf32>
      %66 = vector.extract %65[0, 0, 0, 0] : f32 from vector<1x1x1x1xf32>
      %cst_32 = arith.constant 5.000000e-04 : f32
      %67 = arith.mulf %66, %cst_32 : f32
      %c0_i32_33 = arith.constant 0 : i32
      %68 = arith.cmpi eq, %arg0, %c0_i32_33 : i32
      %cst_34 = arith.constant 0.000000e+00 : f32
      %69 = arith.select %68, %67, %cst_34 : f32
      %70 = tpu.iota {dimensions = array<i32: 2>} : vector<1x8x128xi32>
      %c0_i32_35 = arith.constant 0 : i32
      %71 = vector.broadcast %c0_i32_35 : i32 to vector<1x8x128xi32>
      %72 = arith.cmpi eq, %70, %71 : vector<1x8x128xi32>
      %c1_i32_36 = arith.constant 1 : i32
      %73 = vector.broadcast %c1_i32_36 : i32 to vector<1x8x128xi32>
      %74 = arith.cmpi eq, %70, %73 : vector<1x8x128xi32>
      %c2_i32 = arith.constant 2 : i32
      %75 = vector.broadcast %c2_i32 : i32 to vector<1x8x128xi32>
      %76 = arith.cmpi eq, %70, %75 : vector<1x8x128xi32>
      %cst_37 = arith.constant 0.000000e+00 : f32
      %77 = vector.broadcast %69 : f32 to vector<1x8x128xf32>
      %78 = vector.broadcast %cst_37 : f32 to vector<1x8x128xf32>
      %79 = arith.select %76, %77, %78 : vector<1x8x128xi1>, vector<1x8x128xf32>
      %80 = vector.broadcast %48 : f32 to vector<1x8x128xf32>
      %81 = arith.select %74, %80, %79 : vector<1x8x128xi1>, vector<1x8x128xf32>
      %82 = vector.broadcast %42 : f32 to vector<1x8x128xf32>
      %83 = arith.select %72, %82, %81 : vector<1x8x128xi1>, vector<1x8x128xf32>
      %c0_38 = arith.constant 0 : index
      %c0_39 = arith.constant 0 : index
      %c0_40 = arith.constant 0 : index
      %84 = vector.load %arg6[%c0_38, %c0_39, %c0_40] : memref<1x8x128xf32, #tpu.memory_space<vmem>>, vector<1x8x128xf32>
      tpu.vector_store %arg6[%c0_38, %c0_39, %c0_40], %83 {strides = array<i32>} : memref<1x8x128xf32, #tpu.memory_space<vmem>>, vector<1x8x128xf32>,
    } else {
    }
    return
  }
  func.func @transform_0(%arg0: i32, %arg1: i32) -> (i32, i32) {
    %c1_i32 = arith.constant 1 : i32
    %0 = arith.muli %arg0, %c1_i32 : i32
    %1 = arith.addi %0, %arg1 : i32
    %c0_i32 = arith.constant 0 : i32
    %2 = arith.minsi %1, %c0_i32 : i32
    %c0_i32_0 = arith.constant 0 : i32
    %c0_i32_1 = arith.constant 0 : i32
    return %c0_i32_0, %2 : i32, i32
  }
  func.func @transform_1(%arg0: i32, %arg1: i32) -> (i32, i32) {
    %c1_i32 = arith.constant 1 : i32
    %0 = arith.muli %arg0, %c1_i32 : i32
    %1 = arith.addi %0, %arg1 : i32
    %c0_i32 = arith.constant 0 : i32
    %2 = arith.minsi %1, %c0_i32 : i32
    %c0_i32_0 = arith.constant 0 : i32
    %c0_i32_1 = arith.constant 0 : i32
    return %c0_i32_0, %2 : i32, i32
  }
  func.func @transform_2(%arg0: i32, %arg1: i32) -> (i32, i32) {
    %c0_i32 = arith.constant 0 : i32
    %c0_i32_0 = arith.constant 0 : i32
    %c0_i32_1 = arith.constant 0 : i32
    return %c0_i32, %c0_i32_0 : i32, i32
  }
  func.func @transform_3(%arg0: i32, %arg1: i32) -> (i32, i32, i32) {
    %c0_i32 = arith.constant 0 : i32
    %c0_i32_0 = arith.constant 0 : i32
    %c0_i32_1 = arith.constant 0 : i32
    %c0_i32_2 = arith.constant 0 : i32
    return %c0_i32, %c0_i32_0, %c0_i32_1 : i32, i32, i32
  }
  func.func @transform_4(%arg0: i32, %arg1: i32) -> (i32, i32, i32) {
    %c0_i32 = arith.constant 0 : i32
    %c0_i32_0 = arith.constant 0 : i32
    %c0_i32_1 = arith.constant 0 : i32
    return %arg0, %c0_i32, %c0_i32_0 : i32, i32, i32
  }
}

</mosaic_0001>

<llo_original>
// kernel: tpu_custom_call.1
$region0: #{tpu_custom_call.1}
  #allocation0 [shape = 'u32[]', space=smem, size = 0x4, offset = 0x4, fixed_abs, tag = 'smem constant byte address 0x4 - core index']
  #allocation1 [shape = 'u32[144,128]{1,0:T(1,128)}', space=vmem, size = 0x12000, scoped, tag = 'internal scratch']
  #allocation2 [shape = 'f32[13,1]{1,0:T(8,128)}', space=vmem, size = 0x2000, scoped, tag = 'scratch operand']
  #allocation3 [shape = 'f32[13,1]{1,0:T(8,128)}', space=vmem, size = 0x2000, scoped, tag = 'scratch operand']
  %s0 = inlined_call_operand.hbm [shape: f32[13,300], index: 0, kind: input, shape index: {}]
  %s1 = inlined_call_operand.vmem [shape: s32[1,300], index: 1, kind: input, shape index: {}]
  %s2 = inlined_call_operand.vmem [shape: f32[13,1], index: 2, kind: input, shape index: {}]
  %s3 = inlined_call_operand.hbm [shape: f32[2,16,16], index: 3, kind: input, shape index: {}]
  %s4 = inlined_call_operand.hbm [shape: f32[2,8,128], index: 4, kind: output, shape index: {}]
  %s5 = sld [smem:[#allocation0]]
  $region65: #{tpu_custom_call.1} parent=0
    _
  %s7 = ssub.s32 1, %s5
  %s8 = scalar_select 0, %s7, %s5
  $region1: #{tpu_custom_call.1} parent=0
    #allocation4 [shape = 'u8[49152]{0}', space=vmem, size = 0xc000, scoped, tag = 'input window, operand 0']
    #allocation5 [shape = 's32[2]{0}', space=sflag, size = 0x8, scoped, tag = 'scoped memory for tpu_custom_call.1']
    #allocation6 [shape = 's32[2]{0}', space=sflag, size = 0x8, scoped, tag = 'scoped memory for tpu_custom_call.1']
    #allocation7 [shape = 'u8[16384]{0}', space=vmem, size = 0x4000, scoped, tag = 'input window, operand 3, single buffered']
    #allocation8 [shape = 's32[1]{0}', space=sflag, size = 0x4, scoped, tag = 'scoped memory for tpu_custom_call.1']
    #allocation9 [shape = 'u8[8192]{0}', space=vmem, size = 0x2000, scoped, tag = 'output window, operand 0']
    %9 = vsyncpa [#allocation5], 0
    %s10 = scalar_lea.sflag [#allocation5], 1
    %11 = vsyncpa %s10, 0
    %12 = vsyncpa [#allocation8], 0
    %13 = vsyncpa [#allocation6], 0
    %s14 = scalar_lea.sflag [#allocation6], 1
    %15 = vsyncpa %s14, 0
    loop: start=0, step=1, limit=4
    $region2: #{tpu_custom_call.1} parent=1 // loop_pre_header
      _
    $region3: #{tpu_custom_call.1} parent=1 // loop_header
      %s17 = sphi 0, %s21
      %p18 = scmp.ge.s32.totalorder %s17, 4
      %s24 = sphi 0, %s36
      %s25 = sphi 0, %s32
      %s26 = sphi 0, %s24
      %s27 = sphi 0, %s25
      %s28 = sphi 0, %s26
      %s29 = sphi 0, %s27
      %s45 = sphi 0, %s47
      %s48 = sphi 0, %s45
      %s49 = sphi 0, %s48
      %s65 = sphi 0, %s49
      %s77 = sphi 0, %s79
      %s80 = sphi 0, %s77
      %s81 = sphi 0, %s80
      %s97 = sphi 0, %s81
      %s101 = sphi 0, %s101
      %s103 = sphi 0, %s101
      %s104 = sphi 0, %s103
      %s118 = sphi 0, %s104
      %s122 = sphi 0, %s122
      %s124 = sphi 0, %s122
      %s125 = sphi 0, %s124
      %s139 = sphi 0, %s125
      %s145 = sphi 0, %s147
      %s148 = sphi 0, %s145
      %s149 = sphi 0, %s148
      %s165 = sphi 0, %s149
    $region4: #{tpu_custom_call.1} parent=1 // loop_header_branch
      %20 = sbr.rel (%p18) target = $region8
    $region5: #{tpu_custom_call.1} parent=1 // loop_body
      %s22 = ssub.s32 %s17, 1
      %s23 = ssub.s32 %s17, 2
      %s30 = sadd.s32 1, %s25
      %p31 = scmp.ge.s32.totalorder %s30, 1
      %s32 = scalar_select %p31, 0, %s30
      %s33 = sadd.s32 1, %s24
      %s34 = scalar_select %p31, %s33, %s24
      %p35 = scmp.ge.s32.totalorder %s34, 2
      %s36 = scalar_select %p35, 0, %s34
      %s37 = sadd.s32 %s24, %s25
      %p38 = scmp.lt.s32.totalorder %s37, 0
      %s39 = scalar_select %p38, %s37, 0
      %s40 = sadd.s32 %s36, %s32
      %p41 = scmp.lt.s32.totalorder %s40, 0
      %s42 = scalar_select %p41, %s40, 0
      %s43 = ssub.s32 %s39, %s42
      %p44 = scmp.eq.s32.totalorder %s43, 0
      %s46 = sadd.s32 %s45, 1
      %s47 = scalar_select %p44, %s45, %s46
      %p50 = pneg %p44
      %p51 = scmp.eq.s32.totalorder %s17, 1
      %p52 = por %p50, %p51
      %p53 = scmp.ne.s32.totalorder %s45, %s48
      %p54 = scmp.eq.s32.totalorder %s17, 0
      %p55 = por %p53, %p54
      %p56 = scmp.ne.s32.totalorder %s45, %s48
      %p57 = scmp.eq.s32.totalorder %s22, 1
      %p58 = por %p56, %p57
      %p59 = scmp.ne.s32.totalorder %s48, %s49
      %p60 = scmp.eq.s32.totalorder %s22, 0
      %p61 = por %p59, %p60
      %p62 = scmp.ne.s32.totalorder %s48, %s49
      %p63 = scmp.eq.s32.totalorder %s23, 1
      %p64 = por %p62, %p63
      %p66 = scmp.ne.s32.totalorder %s49, %s65
      %p67 = scmp.eq.s32.totalorder %s23, 0
      %p68 = por %p66, %p67
      %s69 = sadd.s32 %s24, %s25
      %p70 = scmp.lt.s32.totalorder %s69, 0
      %s71 = scalar_select %p70, %s69, 0
      %s72 = sadd.s32 %s36, %s32
      %p73 = scmp.lt.s32.totalorder %s72, 0
      %s74 = scalar_select %p73, %s72, 0
      %s75 = ssub.s32 %s71, %s74
      %p76 = scmp.eq.s32.totalorder %s75, 0
      %s78 = sadd.s32 %s77, 1
      %s79 = scalar_select %p76, %s77, %s78
      %p82 = pneg %p76
      %p83 = scmp.eq.s32.totalorder %s17, 1
      %p84 = por %p82, %p83
      %p85 = scmp.ne.s32.totalorder %s77, %s80
      %p86 = scmp.eq.s32.totalorder %s17, 0
      %p87 = por %p85, %p86
      %p88 = scmp.ne.s32.totalorder %s77, %s80
      %p89 = scmp.eq.s32.totalorder %s22, 1
      %p90 = por %p88, %p89
      %p91 = scmp.ne.s32.totalorder %s80, %s81
      %p92 = scmp.eq.s32.totalorder %s22, 0
      %p93 = por %p91, %p92
      %p94 = scmp.ne.s32.totalorder %s80, %s81
      %p95 = scmp.eq.s32.totalorder %s23, 1
      %p96 = por %p94, %p95
      %p98 = scmp.ne.s32.totalorder %s81, %s97
      %p99 = scmp.eq.s32.totalorder %s23, 0
      %p100 = por %p98, %p99
      %s102 = sadd.s32 %s101, 1
      %p105 = scmp.eq.s32.totalorder %s17, 1
      %p106 = scmp.ne.s32.totalorder %s101, %s103
      %p107 = scmp.eq.s32.totalorder %s17, 0
      %p108 = por %p106, %p107
      %p109 = scmp.ne.s32.totalorder %s101, %s103
      %p110 = scmp.eq.s32.totalorder %s22, 1
      %p111 = por %p109, %p110
      %p112 = scmp.ne.s32.totalorder %s103, %s104
      %p113 = scmp.eq.s32.totalorder %s22, 0
      %p114 = por %p112, %p113
      %p115 = scmp.ne.s32.totalorder %s103, %s104
      %p116 = scmp.eq.s32.totalorder %s23, 1
      %p117 = por %p115, %p116
      %p119 = scmp.ne.s32.totalorder %s104, %s118
      %p120 = scmp.eq.s32.totalorder %s23, 0
      %p121 = por %p119, %p120
      %s123 = sadd.s32 %s122, 1
      %p126 = scmp.eq.s32.totalorder %s17, 1
      %p127 = scmp.ne.s32.totalorder %s122, %s124
      %p128 = scmp.eq.s32.totalorder %s17, 0
      %p129 = por %p127, %p128
      %p130 = scmp.ne.s32.totalorder %s122, %s124
      %p131 = scmp.eq.s32.totalorder %s22, 1
      %p132 = por %p130, %p131
      %p133 = scmp.ne.s32.totalorder %s124, %s125
      %p134 = scmp.eq.s32.totalorder %s22, 0
      %p135 = por %p133, %p134
      %p136 = scmp.ne.s32.totalorder %s124, %s125
      %p137 = scmp.eq.s32.totalorder %s23, 1
      %p138 = por %p136, %p137
      %p140 = scmp.ne.s32.totalorder %s125, %s139
      %p141 = scmp.eq.s32.totalorder %s23, 0
      %p142 = por %p140, %p141
      %s143 = ssub.s32 %s24, %s36
      %p144 = scmp.eq.s32.totalorder %s143, 0
      %s146 = sadd.s32 %s145, 1
      %s147 = scalar_select %p144, %s145, %s146
      %p150 = pneg %p144
      %p151 = scmp.eq.s32.totalorder %s17, 1
      %p152 = por %p150, %p151
      %p153 = scmp.ne.s32.totalorder %s145, %s148
      %p154 = scmp.eq.s32.totalorder %s17, 0
      %p155 = por %p153, %p154
      %p156 = scmp.ne.s32.totalorder %s145, %s148
      %p157 = scmp.eq.s32.totalorder %s22, 1
      %p158 = por %p156, %p157
      %p159 = scmp.ne.s32.totalorder %s148, %s149
      %p160 = scmp.eq.s32.totalorder %s22, 0
      %p161 = por %p159, %p160
      %p162 = scmp.ne.s32.totalorder %s148, %s149
      %p163 = scmp.eq.s32.totalorder %s23, 1
      %p164 = por %p162, %p163
      %p166 = scmp.ne.s32.totalorder %s149, %s165
      %p167 = scmp.eq.s32.totalorder %s23, 0
      %p168 = por %p166, %p167
      %p169 = scmp.le.s32.totalorder 1, %s17
      %p170 = scmp.lt.s32.totalorder %s17, 3
      %p171 = pnand %p169, %p170
      %p172 = pneg %p171
      // Predicated region
      $region9: #{tpu_custom_call.1} parent=5 // pred_check
        _
      $region10: #{tpu_custom_call.1} parent=5 // pred_check_branch
        %174 = sbr.rel (%p171) target = $region12
      $region11: #{tpu_custom_call.1} parent=5 // pred_region
        %s175 = ssub.s32 %s17, 1
        // Predicated region
        $region13: #{tpu_custom_call.1} parent=11 // pred_check
          %p176 = pneg %p114
        $region14: #{tpu_custom_call.1} parent=11 // pred_check_branch
          %178 = sbr.rel (%p176) target = $region16
        $region15: #{tpu_custom_call.1} parent=11 // pred_region
          _
        $region16: #{tpu_custom_call.1} parent=11 // pred_fallthru
          _
        // Predicated region
        $region17: #{tpu_custom_call.1} parent=11 // pred_check
          %p179 = pneg %p135
        $region18: #{tpu_custom_call.1} parent=11 // pred_check_branch
          %181 = sbr.rel (%p179) target = $region20
        $region19: #{tpu_custom_call.1} parent=11 // pred_region
          %s183 = ssub.s32 512, 512
          %184 = vsyncadd [#allocation8], %s183
          %s185 = sshll.u32 [#allocation7], 4
          %s186 = int_to_ptr.vmem [resolvable:$true] %s185
          %191 = dma.hbm_to_vmem [thread:$0]  %s3, 512, %s186, [#allocation8], 128, 128, 8
        $region20: #{tpu_custom_call.1} parent=11 // pred_fallthru
          _
      $region12: #{tpu_custom_call.1} parent=5 // pred_fallthru
        _
      %p192 = scmp.lt.s32.totalorder %s17, 2
      // Predicated region
      $region21: #{tpu_custom_call.1} parent=5 // pred_check
        %p193 = pneg %p192
      $region22: #{tpu_custom_call.1} parent=5 // pred_check_branch
        %195 = sbr.rel (%p193) target = $region24
      $region23: #{tpu_custom_call.1} parent=5 // pred_region
        // Predicated region
        $region25: #{tpu_custom_call.1} parent=23 // pred_check
          %p196 = pneg %p55
        $region26: #{tpu_custom_call.1} parent=23 // pred_check_branch
          %198 = sbr.rel (%p196) target = $region28
        $region27: #{tpu_custom_call.1} parent=23 // pred_region
          %s199 = sand.u32 %s45, 1
          %s200 = scalar_lea.sflag [#allocation5], %s199
          %s201 = sand.u32 %s45, 1
          %s202 = smul.addr %s201, 48
          %s203 = scalar_lea.vmem [#allocation4], %s202
          %s204 = sadd.s32 %s24, %s25
          %p205 = scmp.lt.s32.totalorder %s204, 0
          %s206 = scalar_select %p205, %s204, 0
          %s207 = smul.u32 3, %s206
          %s209 = ssub.s32 768, 768
          %210 = vsyncadd %s200, %s209
          %s211 = smul.addr %s207, 128
          %s212 = scalar_lea.hbm %s0, %s211
          %s213 = sshll.u32 %s203, 4
          %s214 = int_to_ptr.vmem [resolvable:$true] %s213
          %219 = dma.hbm_to_vmem [thread:$0]  %s212, 768, %s214, %s200, 384, 384, 24
        $region28: #{tpu_custom_call.1} parent=23 // pred_fallthru
          _
        // Predicated region
        $region29: #{tpu_custom_call.1} parent=23 // pred_check
          %p220 = pneg %p87
        $region30: #{tpu_custom_call.1} parent=23 // pred_check_branch
          %222 = sbr.rel (%p220) target = $region32
        $region31: #{tpu_custom_call.1} parent=23 // pred_region
          %s223 = sadd.s32 %s24, %s25
          %p224 = scmp.lt.s32.totalorder %s223, 0
          %s225 = scalar_select %p224, %s223, 0
          %s226 = smul.u32 3, %s225
          %p227 = scmp.lt.s32.totalorder %s226, 2
          %s228 = scalar_select %p227, %s226, 2
          %s229 = scalar_lea.vmem %s1, %s228
          %s230 = sadd.s32 %s24, %s25
          %p231 = scmp.lt.s32.totalorder %s230, 0
          %s232 = scalar_select %p231, %s230, 0
          %s233 = smul.u32 3, %s232
        $region32: #{tpu_custom_call.1} parent=23 // pred_fallthru
          _
      $region24: #{tpu_custom_call.1} parent=5 // pred_fallthru
        _
      %p234 = scmp.le.s32.totalorder 1, %s17
      %p235 = scmp.lt.s32.totalorder %s17, 3
      %p236 = pnand %p234, %p235
      %p237 = pneg %p236
      // Predicated region
      $region33: #{tpu_custom_call.1} parent=5 // pred_check
        _
      $region34: #{tpu_custom_call.1} parent=5 // pred_check_branch
        %239 = sbr.rel (%p236) target = $region36
      $region35: #{tpu_custom_call.1} parent=5 // pred_region
        %s240 = ssub.s32 %s17, 1
        %s241 = sand.u32 %s48, 1
        %s242 = scalar_lea.sflag [#allocation5], %s241
        %s243 = sand.u32 %s48, 1
        %s244 = smul.addr %s243, 48
        %s245 = scalar_lea.vmem [#allocation4], %s244
        // Predicated region
        $region37: #{tpu_custom_call.1} parent=35 // pred_check
          %p246 = pneg %p61
        $region38: #{tpu_custom_call.1} parent=35 // pred_check_branch
          %248 = sbr.rel (%p246) target = $region40
        $region39: #{tpu_custom_call.1} parent=35 // pred_region
          %249 = dma.done %s242, 768
        $region40: #{tpu_custom_call.1} parent=35 // pred_fallthru
          _
        // Predicated region
        $region41: #{tpu_custom_call.1} parent=35 // pred_check
          %p250 = pneg %p135
        $region42: #{tpu_custom_call.1} parent=35 // pred_check_branch
          %252 = sbr.rel (%p250) target = $region44
        $region43: #{tpu_custom_call.1} parent=35 // pred_region
          %253 = dma.done [#allocation8], 512
        $region44: #{tpu_custom_call.1} parent=35 // pred_fallthru
          _
        %s254 = sand.u32 %s48, 1
        %s255 = scalar_lea.sflag [#allocation5], %s254
        %s256 = sand.u32 %s48, 1
        %s257 = smul.addr %s256, 48
        %s258 = scalar_lea.vmem [#allocation4], %s257
        %p259 = pneg %p61
        %p260 = pneg %p58
        %s261 = sadd.s32 %s26, %s27
        %p262 = scmp.lt.s32.totalorder %s261, 0
        %s263 = scalar_select %p262, %s261, 0
        %s264 = smul.u32 3, %s263
        %p265 = scmp.lt.s32.totalorder %s264, 2
        %s266 = scalar_select %p265, %s264, 2
        %s267 = scalar_lea.vmem %s1, %s266
        %p268 = pneg %p93
        %p269 = pneg %p90
        %p270 = pneg %p114
        %p271 = pneg %p111
        %p272 = pneg %p135
        %p273 = pneg %p132
        %p274 = pneg %p161
        %p275 = pneg %p158
        %s276 = sand.u32 %s148, 1
        %s277 = scalar_lea.sflag [#allocation6], %s276
        %s278 = sand.u32 %s148, 1
        %s279 = smul.addr %s278, 8
        %s280 = scalar_lea.vmem [#allocation9], %s279
        %s281 = sadd.s32 %s26, %s27
        %p282 = scmp.lt.s32.totalorder %s281, 0
        %s283 = scalar_select %p282, %s281, 0
        %s284 = smul.u32 3, %s283
        %s285 = sadd.s32 %s26, %s27
        %p286 = scmp.lt.s32.totalorder %s285, 0
        %s287 = scalar_select %p286, %s285, 0
        %s288 = smul.u32 3, %s287
        %p289 = scmp.lt.s32.totalorder %s288, 2
        %s290 = scalar_select %p289, %s288, 2
        %s291 = scalar_lea.vmem %s1, %s290
        %s292 = sadd.s32 %s26, %s27
        %p293 = scmp.lt.s32.totalorder %s292, 0
        %s294 = scalar_select %p293, %s292, 0
        %s295 = smul.u32 3, %s294
        %p296 = scmp.eq.s32.totalorder %s27, 0
        // Predicated region
        $region45: #{tpu_custom_call.1} parent=35 // pred_check
          %p297 = pneg %p296
        $region46: #{tpu_custom_call.1} parent=35 // pred_check_branch
          %299 = sbr.rel (%p297) target = $region48
        $region47: #{tpu_custom_call.1} parent=35 // pred_region
          %vm300 = vcmask 7168
          %301 = vst.msk [vmem:[#allocation2] sm:$0xff] %vm300, 0.0
          %vm302 = vcmask 4096
          %303 = vst.msk [vmem:[#allocation2 + $0x8] sm:$0x1f] %vm302, 0.0
          %304 = vst.msk [vmem:[#allocation3] sm:$0xff] %vm300, 0.0
          %305 = vst.msk [vmem:[#allocation3 + $0x8] sm:$0x1f] %vm302, 0.0
        $region48: #{tpu_custom_call.1} parent=35 // pred_fallthru
          _
        %v306 = vld [vmem:[%s245] sm:$0xff]
        %v307 = vld [vmem:[%s245 + $0x8] sm:$0xff]
        %v308 = vld [vmem:[%s245 + $0x10] sm:$0xff]
        %v309 = vld [vmem:[%s245 + $0x18] sm:$0x1f]
        %v310 = vld [vmem:[%s245 + $0x20] sm:$0x1f]
        %v311 = vld [vmem:[%s245 + $0x28] sm:$0x1f]
        %v312 = vld [vmem:[%s291] sm:$0x7]
        %s313 = sadd.s32 %s26, %s27
        %s314 = smul.u32 %s313, 384
        %v315 = vlaneseq
        %v316 = vand.u32 %v315, 127
        %v317 = vadd.s32 %v316, 128
        %v318 = vadd.s32 %v316, 256
        %v319 = vstv %s314
        %v320 = vadd.s32 %v319, %v316
        %v321 = vadd.s32 %v319, %v317
        %v322 = vadd.s32 %v319, %v318
        %vm323 = vcmp.lt.s32.totalorder %v320, 300
        %vm324 = vcmp.lt.s32.totalorder %v321, 300
        %vm325 = vcmp.lt.s32.totalorder %v322, 300
        %v326 = vlaneseq
        %v327 = vshrl.u32 %v326, 7
        %v328 = vsub.s32 0, %v327
        %v329 = vrot.slane %v312, %v328
        %v330 = vlaneseq
        %v331 = vshrl.u32 %v330, 7
        %v332 = vsub.s32 1, %v331
        %v333 = vrot.slane %v312, %v332
        %v334 = vlaneseq
        %v335 = vshrl.u32 %v334, 7
        %v336 = vsub.s32 2, %v335
        %v337 = vrot.slane %v312, %v336
        %v338 = vsel %vm323, %v329, 4294967295
        %v339 = vsel %vm324, %v333, 4294967295
        %v340 = vsel %vm325, %v337, 4294967295
        %v341 = vlaneseq
        %v342 = vshrl.u32 %v341, 7
        %v343 = vadd.s32 %v342, 8
        %v344 = vlaneseq
        %v345 = vshrl.u32 %v344, 7
        %v346 = vsub.s32 0, %v345
        %v347 = vrot.slane %v338, %v346
        %v348 = vlaneseq
        %v349 = vshrl.u32 %v348, 7
        %v350 = vsub.s32 0, %v349
        %v351 = vrot.slane %v339, %v350
        %v352 = vlaneseq
        %v353 = vshrl.u32 %v352, 7
        %v354 = vsub.s32 0, %v353
        %v355 = vrot.slane %v340, %v354
        %vm356 = vcmp.eq.s32.totalorder %v342, %v347
        %vm357 = vcmp.eq.s32.totalorder %v342, %v351
        %vm358 = vcmp.eq.s32.totalorder %v342, %v355
        %vm359 = vcmp.eq.s32.totalorder %v343, %v347
        %vm360 = vcmp.eq.s32.totalorder %v343, %v351
        %vm361 = vcmp.eq.s32.totalorder %v343, %v355
        %v362 = vld [vmem:[#allocation2] sm:$0xff]
        %v363 = vld [vmem:[#allocation2 + $0x8] sm:$0x1f]
        %v364 = vsel %vm356, %v306, 0.0
        %v365 = vsel %vm357, %v307, 0.0
        %v366 = vsel %vm358, %v308, 0.0
        %v367 = vsel %vm359, %v309, 0.0
        %v368 = vsel %vm360, %v310, 0.0
        %v369 = vsel %vm361, %v311, 0.0
        %v370 = vadd.f32 %v364, %v365
        %v371 = vadd.f32 %v370, %v366
        %372 = vadd.xlane.f32.xlu0 %v371
        %v373 = vpop.xlane.xlu0 %372
        %vm374 = vcmask 1044480
        %v375 = vsel %vm374, %v367, 0.0
        %v376 = vsel %vm374, %v368, 0.0
        %v377 = vadd.f32 %v375, %v376
        %v378 = vsel %vm374, %v369, 0.0
        %v379 = vadd.f32 %v377, %v378
        %380 = vadd.xlane.f32.xlu0 %v379
        %v381 = vpop.xlane.xlu0 %380
        %v382 = vadd.f32 %v362, %v373
        %v383 = vadd.f32 %v363, %v381
        %vm384 = vcmask 7168
        %385 = vst.msk [vmem:[#allocation2] sm:$0xff] %vm384, %v382
        %vm386 = vcmask 4096
        %387 = vst.msk [vmem:[#allocation2 + $0x8] sm:$0x1f] %vm386, %v383
        %v388 = vld [vmem:[#allocation3] sm:$0xff]
        %v389 = vld [vmem:[#allocation3 + $0x8] sm:$0x1f]
        %v390 = vsel %vm356, 1, 0
        %v391 = vsel %vm357, 1, 0
        %v392 = vsel %vm358, 1, 0
        %v393 = vsel %vm359, 1, 0
        %v394 = vsel %vm360, 1, 0
        %v395 = vsel %vm361, 1, 0
        %v396 = vcvt.s32.f32 %v390
        %v397 = vcvt.s32.f32 %v391
        %v398 = vcvt.s32.f32 %v392
        %v399 = vcvt.s32.f32 %v393
        %v400 = vcvt.s32.f32 %v394
        %v401 = vcvt.s32.f32 %v395
        %v402 = vadd.f32 %v396, %v397
        %v403 = vadd.f32 %v402, %v398
        %404 = vadd.xlane.f32.xlu0 %v403
        %v405 = vpop.xlane.xlu0 %404
        %v406 = vsel %vm374, %v399, 0.0
        %v407 = vsel %vm374, %v400, 0.0
        %v408 = vadd.f32 %v406, %v407
        %v409 = vsel %vm374, %v401, 0.0
        %v410 = vadd.f32 %v408, %v409
        %411 = vadd.xlane.f32.xlu0 %v410
        %v412 = vpop.xlane.xlu0 %411
        %v413 = vadd.f32 %v388, %v405
        %v414 = vadd.f32 %v389, %v412
        %415 = vst.msk [vmem:[#allocation3] sm:$0xff] %vm384, %v413
        %416 = vst.msk [vmem:[#allocation3 + $0x8] sm:$0x1f] %vm386, %v414
        // Predicated region
        $region49: #{tpu_custom_call.1} parent=35 // pred_check
          %p417 = pneg %p296
        $region50: #{tpu_custom_call.1} parent=35 // pred_check_branch
          %419 = sbr.rel (%p417) target = $region52
        $region51: #{tpu_custom_call.1} parent=35 // pred_region
          %v420 = vld [vmem:[%s2] sm:$0xff]
          %v421 = vld [vmem:[%s2 + $0x8] sm:$0x1f]
          %v422 = vld [vmem:[#allocation2] sm:$0xff]
          %v423 = vld [vmem:[#allocation2 + $0x8] sm:$0x1f]
          %v424 = vmul.f32 %v420, %v422
          %v425 = vmul.f32 %v421, %v423
          %v426 = vsel %vm384, %v424, 0.0
          %v427 = vsel %vm386, %v425, 0.0
          %v428 = vadd.f32 %v426, %v427
          %429 = vadd.xlane.f32.xlu0 %v428
          %v430 = vpop.xlane.xlu0 %429
          %v431 = vrot.slane %v430, 4
          %v432 = vadd.f32 %v430, %v431
          %v433 = vrot.slane %v432, 2
          %v434 = vadd.f32 %v432, %v433
          %v435 = vrot.slane %v434, 1
          %v436 = vadd.f32 %v434, %v435
          %s437 = vtos %v436
          %s438 = ssub.f32 0.0, %s437
          %v439 = vld [vmem:[#allocation3] sm:$0xff]
          %v440 = vld [vmem:[#allocation3 + $0x8] sm:$0x1f]
          %v441 = vmul.f32 %v420, %v439
          %v442 = vmul.f32 %v421, %v440
          %v443 = vsel %vm384, %v441, 0.0
          %v444 = vsel %vm386, %v442, 0.0
          %v445 = vadd.f32 %v443, %v444
          %446 = vadd.xlane.f32.xlu0 %v445
          %v447 = vpop.xlane.xlu0 %446
          %v448 = vrot.slane %v447, 4
          %v449 = vadd.f32 %v447, %v448
          %v450 = vrot.slane %v449, 2
          %v451 = vadd.f32 %v449, %v450
          %v452 = vrot.slane %v451, 1
          %v453 = vadd.f32 %v451, %v452
          %s454 = vtos %v453
          %v455 = vld [vmem:[#allocation7] sm:$0xff]
          %v456 = vld [vmem:[#allocation7 + $0x8] sm:$0xff]
          %v457 = vld [vmem:[#allocation7 + $0x10] sm:$0xff]
          %v458 = vld [vmem:[#allocation7 + $0x18] sm:$0xff]
          %vm459 = vcmask 130048
          %v461 = vsel %vm459, %v455, 0
          %v464 = vsel %vm459, %v456, 0
          %466 = vmatprep.subr.mxu0 0.0
          %467 = vmatpush1.xpose.msra.mxu0 0.0
          %468 = vmatprep.subr.mxu0 0.0
          %469 = vmatpush1.xpose.msra.mxu0 0.0
          %470 = vmatprep.subr.mxu0 0.0
          %471 = vmatpush1.xpose.msra.mxu0 0.0
          %472 = vmatprep.subr.mxu0 0.0
          %473 = vmatpush1.xpose.msra.mxu0 0.0
          %474 = vmatprep.subr.mxu0 0.0
          %475 = vmatpush1.xpose.msra.mxu0 0.0
          %476 = vmatprep.subr.mxu0 0.0
          %477 = vmatpush1.xpose.msra.mxu0 0.0
          %478 = vmatprep.subr.mxu0 0.0
          %479 = vmatpush1.xpose.msra.mxu0 0.0
          %480 = vmatprep.subr.mxu0 0.0
          %481 = vmatpush1.xpose.msra.mxu0 0.0
          %482 = vmatprep.subr.mxu0 0.0
          %483 = vmatpush1.xpose.msra.mxu0 0.0
          %484 = vmatprep.subr.mxu0 0.0
          %485 = vmatpush1.xpose.msra.mxu0 0.0
          %486 = vmatprep.subr.mxu0 0.0
          %487 = vmatpush1.xpose.msra.mxu0 0.0
          %488 = vmatprep.subr.mxu0 0.0
          %489 = vmatpush1.xpose.msra.mxu0 0.0
          %490 = vmatprep.subr.mxu0 0.0
          %491 = vmatpush1.xpose.msra.mxu0 0.0
          %492 = vmatprep.subr.mxu0 0.0
          %493 = vmatpush1.xpose.msra.mxu0 0.0
          %494 = vmatprep.subr.mxu0 0.0
          %495 = vmatpush1.xpose.msra.mxu0 %v464
          %496 = vmatprep.subr.mxu0 0.0
          %497 = vmatpush1.xpose.msra.mxu0 %v461
          %498 = vmatprep.subr.mxu0 0.0
          %499 = vmatpush2.xpose.msra.mxu0 0.0
          %500 = vmatprep.subr.mxu0 0.0
          %501 = vmatpush2.xpose.msra.mxu0 0.0
          %502 = vmatprep.subr.mxu0 0.0
          %503 = vmatpush2.xpose.msra.mxu0 0.0
          %504 = vmatprep.subr.mxu0 0.0
          %505 = vmatpush2.xpose.msra.mxu0 0.0
          %506 = vmatprep.subr.mxu0 0.0
          %507 = vmatpush2.xpose.msra.mxu0 0.0
          %508 = vmatprep.subr.mxu0 0.0
          %509 = vmatpush2.xpose.msra.mxu0 0.0
          %510 = vmatprep.subr.mxu0 0.0
          %511 = vmatpush2.xpose.msra.mxu0 0.0
          %512 = vmatprep.subr.mxu0 0.0
          %513 = vmatpush2.xpose.msra.mxu0 0.0
          %514 = vmatprep.subr.mxu0 0.0
          %515 = vmatpush2.xpose.msra.mxu0 0.0
          %516 = vmatprep.subr.mxu0 0.0
          %517 = vmatpush2.xpose.msra.mxu0 0.0
          %518 = vmatprep.subr.mxu0 0.0
          %519 = vmatpush2.xpose.msra.mxu0 0.0
          %520 = vmatprep.subr.mxu0 0.0
          %521 = vmatpush2.xpose.msra.mxu0 0.0
          %522 = vmatprep.subr.mxu0 0.0
          %523 = vmatpush2.xpose.msra.mxu0 0.0
          %524 = vmatprep.subr.mxu0 0.0
          %525 = vmatpush2.xpose.msra.mxu0 0.0
          %526 = vmatprep.subr.mxu0 0.0
          %527 = vmatpush2.xpose.msra.mxu0 0.0
          %528 = vmatprep.subr.mxu0 0.0
          %529 = vmatpush2.xpose.msra.mxu0 0.0
          %530 = vmatprep.mubr.f32.mxu0 0.0
          %531 = vmatmul.mubr.f32.gmra.mxu0 %v461
          %v532 = vpop.f32.mrf.mxu0
          %v533 = vadd.f32 0.0, %v532
          %v534 = vpop.f32.mrf.mxu0
          %535 = vmatprep.mubr.f32.mxu0 0.0
          %536 = vmatmul.mubr.f32.gmra.mxu0 %v464
          %v537 = vpop.f32.mrf.mxu0
          %v538 = vadd.f32 0.0, %v537
          %v539 = vpop.f32.mrf.mxu0
          %540 = vdwg.mxu0
          %v542 = vsel %vm459, %v457, 0
          %v545 = vsel %vm459, %v458, 0
          %547 = vmatprep.subr.mxu0 0.0
          %548 = vmatpush1.xpose.msra.mxu0 0.0
          %549 = vmatprep.subr.mxu0 0.0
          %550 = vmatpush1.xpose.msra.mxu0 0.0
          %551 = vmatprep.subr.mxu0 0.0
          %552 = vmatpush1.xpose.msra.mxu0 0.0
          %553 = vmatprep.subr.mxu0 0.0
          %554 = vmatpush1.xpose.msra.mxu0 0.0
          %555 = vmatprep.subr.mxu0 0.0
          %556 = vmatpush1.xpose.msra.mxu0 0.0
          %557 = vmatprep.subr.mxu0 0.0
          %558 = vmatpush1.xpose.msra.mxu0 0.0
          %559 = vmatprep.subr.mxu0 0.0
          %560 = vmatpush1.xpose.msra.mxu0 0.0
          %561 = vmatprep.subr.mxu0 0.0
          %562 = vmatpush1.xpose.msra.mxu0 0.0
          %563 = vmatprep.subr.mxu0 0.0
          %564 = vmatpush1.xpose.msra.mxu0 0.0
          %565 = vmatprep.subr.mxu0 0.0
          %566 = vmatpush1.xpose.msra.mxu0 0.0
          %567 = vmatprep.subr.mxu0 0.0
          %568 = vmatpush1.xpose.msra.mxu0 0.0
          %569 = vmatprep.subr.mxu0 0.0
          %570 = vmatpush1.xpose.msra.mxu0 0.0
          %571 = vmatprep.subr.mxu0 0.0
          %572 = vmatpush1.xpose.msra.mxu0 0.0
          %573 = vmatprep.subr.mxu0 0.0
          %574 = vmatpush1.xpose.msra.mxu0 0.0
          %575 = vmatprep.subr.mxu0 0.0
          %576 = vmatpush1.xpose.msra.mxu0 %v545
          %577 = vmatprep.subr.mxu0 0.0
          %578 = vmatpush1.xpose.msra.mxu0 %v542
          %579 = vmatprep.subr.mxu0 0.0
          %580 = vmatpush2.xpose.msra.mxu0 0.0
          %581 = vmatprep.subr.mxu0 0.0
          %582 = vmatpush2.xpose.msra.mxu0 0.0
          %583 = vmatprep.subr.mxu0 0.0
          %584 = vmatpush2.xpose.msra.mxu0 0.0
          %585 = vmatprep.subr.mxu0 0.0
          %586 = vmatpush2.xpose.msra.mxu0 0.0
          %587 = vmatprep.subr.mxu0 0.0
          %588 = vmatpush2.xpose.msra.mxu0 0.0
          %589 = vmatprep.subr.mxu0 0.0
          %590 = vmatpush2.xpose.msra.mxu0 0.0
          %591 = vmatprep.subr.mxu0 0.0
          %592 = vmatpush2.xpose.msra.mxu0 0.0
          %593 = vmatprep.subr.mxu0 0.0
          %594 = vmatpush2.xpose.msra.mxu0 0.0
          %595 = vmatprep.subr.mxu0 0.0
          %596 = vmatpush2.xpose.msra.mxu0 0.0
          %597 = vmatprep.subr.mxu0 0.0
          %598 = vmatpush2.xpose.msra.mxu0 0.0
          %599 = vmatprep.subr.mxu0 0.0
          %600 = vmatpush2.xpose.msra.mxu0 0.0
          %601 = vmatprep.subr.mxu0 0.0
          %602 = vmatpush2.xpose.msra.mxu0 0.0
          %603 = vmatprep.subr.mxu0 0.0
          %604 = vmatpush2.xpose.msra.mxu0 0.0
          %605 = vmatprep.subr.mxu0 0.0
          %606 = vmatpush2.xpose.msra.mxu0 0.0
          %607 = vmatprep.subr.mxu0 0.0
          %608 = vmatpush2.xpose.msra.mxu0 0.0
          %609 = vmatprep.subr.mxu0 0.0
          %610 = vmatpush2.xpose.msra.mxu0 0.0
          %611 = vmatprep.mubr.f32.mxu0 0.0
          %612 = vmatmul.mubr.f32.gmra.mxu0 %v542
          %v613 = vpop.f32.mrf.mxu0
          %v614 = vadd.f32 0.0, %v613
          %v615 = vpop.f32.mrf.mxu0
          %616 = vmatprep.mubr.f32.mxu0 0.0
          %617 = vmatmul.mubr.f32.gmra.mxu0 %v545
          %v618 = vpop.f32.mrf.mxu0
          %v619 = vadd.f32 0.0, %v618
          %v620 = vpop.f32.mrf.mxu0
          %621 = vdwg.mxu0
          %vm622 = vcmp.eq.s32.totalorder %v342, %v316
          %vm623 = vcmp.eq.s32.totalorder %v343, %v316
          %v624 = vsel %vm622, 1, 0
          %v625 = vsel %vm623, 1, 0
          %v626 = vcvt.s32.f32 %v624
          %v627 = vcvt.s32.f32 %v625
          %v628 = vsub.f32 %v533, %v626
          %v629 = vsub.f32 %v538, %v627
          %v630 = vsub.f32 %v614, %v626
          %v631 = vsub.f32 %v619, %v627
          %v632 = vmul.f32 %v628, %v628
          %v633 = vmul.f32 %v629, %v629
          %v634 = vmul.f32 %v630, %v630
          %v635 = vmul.f32 %v631, %v631
          %v636 = vsel %vm459, %v632, 0.0
          %637 = vadd.xlane.f32.xlu0 %v636
          %v638 = vpop.xlane.xlu0 %637
          %v639 = vsel %vm459, %v633, 0.0
          %640 = vadd.xlane.f32.xlu0 %v639
          %v641 = vpop.xlane.xlu0 %640
          %v642 = vsel %vm459, %v634, 0.0
          %643 = vadd.xlane.f32.xlu0 %v642
          %v644 = vpop.xlane.xlu0 %643
          %v645 = vsel %vm459, %v635, 0.0
          %646 = vadd.xlane.f32.xlu0 %v645
          %v647 = vpop.xlane.xlu0 %646
          %v648 = vadd.f32 %v638, %v641
          %v649 = vrot.slane %v648, 4
          %v650 = vadd.f32 %v648, %v649
          %v651 = vrot.slane %v650, 2
          %v652 = vadd.f32 %v650, %v651
          %v653 = vrot.slane %v652, 1
          %v654 = vadd.f32 %v652, %v653
          %v655 = vadd.f32 %v644, %v647
          %v656 = vrot.slane %v655, 4
          %v657 = vadd.f32 %v655, %v656
          %v658 = vrot.slane %v657, 2
          %v659 = vadd.f32 %v657, %v658
          %v660 = vrot.slane %v659, 1
          %v661 = vadd.f32 %v659, %v660
          %v662 = vrsqrt.pop %v654
          %v663 = vmul.f32 %v654, %v662
          %vm664 = vcmp.eq.f32.partialorder %v654, inf
          %v665 = vsel %vm664, %v654, %v663
          %vm666 = vcmp.eq.f32.partialorder %v654, 0.0
          %v667 = vand.u32 %v654, 2147483648
          %v668 = vsel %vm666, %v667, %v665
          %v669 = vrsqrt.pop %v661
          %v670 = vmul.f32 %v661, %v669
          %vm671 = vcmp.eq.f32.partialorder %v661, inf
          %v672 = vsel %vm671, %v661, %v670
          %vm673 = vcmp.eq.f32.partialorder %v661, 0.0
          %v674 = vand.u32 %v661, 2147483648
          %v675 = vsel %vm673, %v674, %v672
          %vm676 = vcmask 0
          %v677 = vsel %vm676, %v668, 0.0
          %v678 = vsel %vm676, %v675, 0.0
          %v679 = vadd.f32 %v677, %v678
          %680 = vadd.xlane.f32.xlu0 %v679
          %v681 = vpop.xlane.xlu0 %680
          %v682 = vrot.slane %v681, 4
          %v683 = vadd.f32 %v681, %v682
          %v684 = vrot.slane %v683, 2
          %v685 = vadd.f32 %v683, %v684
          %v686 = vrot.slane %v685, 1
          %v687 = vadd.f32 %v685, %v686
          %s688 = vtos %v687
          %s689 = smul.f32 %s688, 0.0005
          %p690 = scmp.eq.s32.totalorder %s26, 0
          %s691 = scalar_select %p690, %s689, 0.0
          %vm692 = vcmp.eq.s32.totalorder %v316, 0
          %vm693 = vcmp.eq.s32.totalorder %v316, 1
          %vm694 = vcmp.eq.s32.totalorder %v316, 2
          %v695 = vstv %s691
          %v696 = vsel %vm694, %v695, 0.0
          %v697 = vstv %s454
          %v698 = vsel %vm693, %v697, %v696
          %v699 = vstv %s438
          %v700 = vsel %vm692, %v699, %v698
          %701 = vst [vmem:[%s280] sm:$0xff] %v700
        $region52: #{tpu_custom_call.1} parent=35 // pred_fallthru
          _
        %s702 = sand.u32 %s148, 1
        %s703 = scalar_lea.sflag [#allocation6], %s702
        %s704 = sand.u32 %s148, 1
        %s705 = smul.addr %s704, 8
        %s706 = scalar_lea.vmem [#allocation9], %s705
        // Predicated region
        $region53: #{tpu_custom_call.1} parent=35 // pred_check
          %p707 = pneg %p158
        $region54: #{tpu_custom_call.1} parent=35 // pred_check_branch
          %709 = sbr.rel (%p707) target = $region56
        $region55: #{tpu_custom_call.1} parent=35 // pred_region
          %s711 = ssub.s32 128, 128
          %712 = vsyncadd %s703, %s711
          %s713 = smul.addr %s26, 128
          %s714 = scalar_lea.hbm %s4, %s713
          %s716 = sshll.u32 %s706, 4
          %s717 = int_to_ptr.vmem [resolvable:$true] %s716
          %719 = dma.vmem_to_hbm [thread:$0]  %s717, 128, %s714, %s703
        $region56: #{tpu_custom_call.1} parent=35 // pred_fallthru
          _
      $region36: #{tpu_custom_call.1} parent=5 // pred_fallthru
        _
      %p720 = scmp.le.s32.totalorder 2, %s17
      // Predicated region
      $region57: #{tpu_custom_call.1} parent=5 // pred_check
        %p721 = pneg %p720
      $region58: #{tpu_custom_call.1} parent=5 // pred_check_branch
        %723 = sbr.rel (%p721) target = $region60
      $region59: #{tpu_custom_call.1} parent=5 // pred_region
        %s724 = ssub.s32 %s17, 2
        // Predicated region
        $region61: #{tpu_custom_call.1} parent=59 // pred_check
          %p725 = pneg %p164
        $region62: #{tpu_custom_call.1} parent=59 // pred_check_branch
          %727 = sbr.rel (%p725) target = $region64
        $region63: #{tpu_custom_call.1} parent=59 // pred_region
          %s728 = sand.u32 %s149, 1
          %s729 = scalar_lea.sflag [#allocation6], %s728
          %s730 = sand.u32 %s149, 1
          %s731 = smul.addr %s730, 8
          %s732 = scalar_lea.vmem [#allocation9], %s731
          %733 = dma.done %s729, 128
        $region64: #{tpu_custom_call.1} parent=59 // pred_fallthru
          _
      $region60: #{tpu_custom_call.1} parent=5 // pred_fallthru
        _
    $region6: #{tpu_custom_call.1} parent=1 // loop_footer
      %s21 = sadd.s32 1, %s17
    $region7: #{tpu_custom_call.1} parent=1 // loop_footer_branch
      %16 = sbr.rel target = $region3
    $region8: #{tpu_custom_call.1} parent=1 // loop_exit
      _
    %734 = vsyncpa [#allocation5], 1
    %s735 = scalar_lea.sflag [#allocation5], 1
    %736 = vsyncpa %s735, 1
    %737 = vsyncpa [#allocation8], 1
    %738 = vsyncpa [#allocation6], 1
    %s739 = scalar_lea.sflag [#allocation6], 1
    %740 = vsyncpa %s739, 1

</llo_original>
